<compile_context>
chip_gen: v7x
topology: tpu7x:2x2x1
jax: 0.10.0
libtpu: 0.0.40
codegen_flags: <defaults>
</compile_context>

<pallas_src>
import functools

import jax
import jax.numpy as jnp
from jax.experimental import pallas as pl
from jax.experimental.pallas import tpu as pltpu


# ----------------------------------------------------------------------------
# Pallas kernel: row-tiled matmul + bias — the conv compute hot path.
# ----------------------------------------------------------------------------
def _matmul_bias_kernel(x_ref, w_ref, b_ref, o_ref):
    # x_ref: (tm, K) im2col rows, w_ref: (K, Cp), b_ref: (1, Cp) with Cp % 128 == 0
    acc = jnp.dot(x_ref[...], w_ref[...], preferred_element_type=jnp.float32)
    o_ref[...] = (acc + b_ref[...]).astype(o_ref.dtype)


def _pick_row_tile(M, tm_max=512, min_grid=2):
    """Big tiles amortize ~0.35us/step overhead; keep >=2 steps for v7x's 2 TCs."""
    tm = min(tm_max, M)
    while tm > 128 and -(-M // tm) < min_grid:
        tm //= 2
    return max(8, ((tm + 7) // 8) * 8)


def _matmul_bias(xcol, wmat, bias, out_dtype, tm_max=512):
    M, K = xcol.shape
    _, Cp = wmat.shape            # Cp already lane-padded to a multiple of 128

    tm = _pick_row_tile(M, tm_max)
    n_tiles = -(-M // tm)
    Mp = n_tiles * tm
    if Mp != M:                   # only pad when rows are not tile-aligned
        xcol = jnp.pad(xcol, ((0, Mp - M), (0, 0)))

    out_itemsize = jnp.dtype(out_dtype).itemsize
    cost = pl.CostEstimate(
        flops=2 * Mp * K * Cp,
        transcendentals=0,
        bytes_accessed=(xcol.dtype.itemsize * Mp * K
                        + wmat.dtype.itemsize * K * Cp
                        + out_itemsize * Mp * Cp),
    )

    out = pl.pallas_call(
        _matmul_bias_kernel,
        out_shape=jax.ShapeDtypeStruct((Mp, Cp), out_dtype),
        grid_spec=pltpu.PrefetchScalarGridSpec(
            num_scalar_prefetch=0,
            grid=(n_tiles,),
            in_specs=[
                pl.BlockSpec((tm, K), lambda i: (i, 0)),
                # Grid-invariant operands: single-buffered (no useless 2nd copy).
                pl.BlockSpec((K, Cp), lambda i: (0, 0),
                             pipeline_mode=pl.Buffered(1)),
                pl.BlockSpec((1, Cp), lambda i: (0, 0),
                             pipeline_mode=pl.Buffered(1)),
            ],
            out_specs=pl.BlockSpec((tm, Cp), lambda i: (i, 0)),
        ),
        compiler_params=pltpu.CompilerParams(
            dimension_semantics=("parallel",),
            vmem_limit_bytes=32 * 1024 * 1024,
        ),
        cost_estimate=cost,
    )(xcol, wmat, bias)
    return out[:M]


# ----------------------------------------------------------------------------
# TransLayer_rule2 forward: dynamic "SAME" padding + Conv2d(padding=0).
# ----------------------------------------------------------------------------
def _calculate_padding(input_size, stride, kernel_size, dilation):
    output_size = (input_size + stride - 1) // stride
    total_padding = max(
        (output_size - 1) * stride + (kernel_size - 1) * dilation + 1 - input_size, 0
    )
    return total_padding


@functools.partial(jax.jit, static_argnames=("stride", "dilation", "compute_dtype"))
def trans_layer_rule2_forward(x, weight, bias, stride=(1, 1), dilation=(1, 1),
                              compute_dtype=jnp.float32):
    """x: (N, C_in, H, W) f32; weight: (C_out, C_in, KH, KW); bias: (C_out,)."""
    N, C_in, H, W = x.shape
    C_out, _, KH, KW = weight.shape
    sh, sw = stride
    dh, dw = dilation

    # TF-SAME style padding, exactly as in the PyTorch module.
    pad_h = _calculate_padding(H, sh, KH, dh)
    pad_w = _calculate_padding(W, sw, KW, dw)

    # NCHW -> NHWC once (one cheap pass over x), then pad spatially.
    x_nhwc = jnp.transpose(x, (0, 2, 3, 1))
    x_p = jnp.pad(
        x_nhwc,
        ((0, 0),
         (pad_h // 2, pad_h - pad_h // 2),
         (pad_w // 2, pad_w - pad_w // 2),
         (0, 0)),
    )
    Hp, Wp = x_p.shape[1], x_p.shape[2]
    H_out = (Hp - (KH - 1) * dh - 1) // sh + 1
    W_out = (Wp - (KW - 1) * dw - 1) // sw + 1

    # im2col built directly in (N, H_out, W_out, KH*KW*C_in) order so the
    # flatten to X[M, K] below is a free, contiguous reshape (no transpose
    # pass over the 9x-blown-up patches).
    # TODO(synk): for large C_in*KH*KW, fuse this gather into the Pallas kernel
    # (manual DMA of shifted NHWC slabs) and add a K grid axis with an f32
    # VMEM accumulator (pl.when init/finalize) instead of materializing X.
    taps = []
    for kh in range(KH):
        for kw in range(KW):
            h0, w0 = kh * dh, kw * dw
            taps.append(
                x_p[:, h0:h0 + (H_out - 1) * sh + 1:sh,
                    w0:w0 + (W_out - 1) * sw + 1:sw, :]
            )  # (N, H_out, W_out, C_in)
    patches = jnp.stack(taps, axis=3)            # (N, H_out, W_out, KH*KW, C_in)
    M = N * H_out * W_out
    K = C_in * KH * KW
    xcol = patches.reshape(M, K).astype(compute_dtype)

    # Weight permuted to the same (kh, kw, c_in) K-order; pad C_out to a
    # multiple of 128 so the kernel's output block is lane-dense.
    Cp = 128 * (-(-C_out // 128))
    wmat = jnp.transpose(weight, (2, 3, 1, 0)).reshape(K, C_out)
    wmat = jnp.pad(wmat, ((0, 0), (0, Cp - C_out))).astype(compute_dtype)
    bias_p = jnp.pad(bias, (0, Cp - C_out)).reshape(1, Cp).astype(jnp.float32)

    # Hot path in Pallas.
    ycol = _matmul_bias(xcol, wmat, bias_p, out_dtype=x.dtype)   # (M, Cp)

    # Drop pad columns, back to NCHW.
    y = ycol[:, :C_out].reshape(N, H_out, W_out, C_out).transpose(0, 3, 1, 2)
    return y


if __name__ == "__main__":
    # Small shapes consistent with the module: Conv2d(4 -> 8, 3x3, stride 1).
    N, C_in, H, W = 2, 4, 16, 16
    C_out, KH, KW = 8, 3, 3
    stride = (1, 1)
    dilation = (1, 1)

    key = jax.random.PRNGKey(0)
    kx, kw, kb = jax.random.split(key, 3)
    x = jax.random.normal(kx, (N, C_in, H, W), dtype=jnp.float32)
    weight = jax.random.normal(kw, (C_out, C_in, KH, KW), dtype=jnp.float32) * 0.1
    bias = jax.random.normal(kb, (C_out,), dtype=jnp.float32) * 0.1

    y = trans_layer_rule2_forward(x, weight, bias, stride=stride, dilation=dilation)
    y = jax.block_until_ready(y)

    # Sanity check against XLA's conv with the same SAME-style padding.
    pad_h = _calculate_padding(H, stride[0], KH, dilation[0])
    pad_w = _calculate_padding(W, stride[1], KW, dilation[1])
    y_ref = jax.lax.conv_general_dilated(
        x,
        weight,
        window_strides=stride,
        padding=((pad_h // 2, pad_h - pad_h // 2), (pad_w // 2, pad_w - pad_w // 2)),
        rhs_dilation=dilation,
        dimension_numbers=("NCHW", "OIHW", "NCHW"),
    ) + bias.reshape(1, C_out, 1, 1)
    assert y.shape == y_ref.shape, (y.shape, y_ref.shape)
    err = float(jnp.max(jnp.abs(y - y_ref)))
    assert err < 1e-3, err

    print("KERNEL_OK")
</pallas_src>

<mosaic_0001>
module attributes {stable_mosaic.version = 11 : i64} {
  func.func @_matmul_bias_kernel(%arg0: i32, %arg1: memref<256x36xf32, #tpu.memory_space<vmem>>, %arg2: memref<36x128xf32, #tpu.memory_space<vmem>>, %arg3: memref<1x128xf32, #tpu.memory_space<vmem>>, %arg4: memref<256x128xf32, #tpu.memory_space<vmem>>) attributes {dimension_semantics = [#tpu.dimension_semantics<parallel>], iteration_bounds = array<i64: 2>, scalar_prefetch = 0 : i64, scratch_operands = 0 : i64, tpu.core_type = #tpu.core_type<tc>, window_params = [{transform_indices = @transform_0, window_bounds = array<i64: 256, 36>}, {pipeline_mode = #tpu.pipeline_mode<synchronous>, transform_indices = @transform_1, window_bounds = array<i64: 36, 128>}, {pipeline_mode = #tpu.pipeline_mode<synchronous>, transform_indices = @transform_2, window_bounds = array<i64: 1, 128>}, {transform_indices = @transform_3, window_bounds = array<i64: 256, 128>}]} {
    %c0 = arith.constant 0 : index
    %c0_0 = arith.constant 0 : index
    %0 = vector.load %arg1[%c0, %c0_0] : memref<256x36xf32, #tpu.memory_space<vmem>>, vector<256x36xf32>
    %c0_1 = arith.constant 0 : index
    %c0_2 = arith.constant 0 : index
    %1 = vector.load %arg2[%c0_1, %c0_2] : memref<36x128xf32, #tpu.memory_space<vmem>>, vector<36x128xf32>
    %cst = arith.constant dense<0.000000e+00> : vector<256x128xf32>
    %2 = tpu.matmul %0, %1, %cst {dimension_numbers = #tpu.dot_dimension_numbers<[1], [0], [0], [1], [0, 0, 1, 1], [], []>} : vector<256x36xf32>, vector<36x128xf32>, vector<256x128xf32> -> vector<256x128xf32>
    %c0_3 = arith.constant 0 : index
    %c0_4 = arith.constant 0 : index
    %3 = vector.load %arg3[%c0_3, %c0_4] : memref<1x128xf32, #tpu.memory_space<vmem>>, vector<1x128xf32>
    %4 = vector.broadcast %3 : vector<1x128xf32> to vector<256x128xf32>
    %5 = arith.addf %2, %4 : vector<256x128xf32>
    %c0_5 = arith.constant 0 : index
    %c0_6 = arith.constant 0 : index
    %6 = vector.load %arg4[%c0_5, %c0_6] : memref<256x128xf32, #tpu.memory_space<vmem>>, vector<256x128xf32>
    tpu.vector_store %arg4[%c0_5, %c0_6], %5 {strides = array<i32>} : memref<256x128xf32, #tpu.memory_space<vmem>>, vector<256x128xf32>,
    return
  }
  func.func @transform_0(%arg0: i32) -> (i32, i32) {
    %c0_i32 = arith.constant 0 : i32
    %c0_i32_0 = arith.constant 0 : i32
    return %arg0, %c0_i32 : i32, i32
  }
  func.func @transform_1(%arg0: i32) -> (i32, i32) {
    %c0_i32 = arith.constant 0 : i32
    %c0_i32_0 = arith.constant 0 : i32
    %c0_i32_1 = arith.constant 0 : i32
    return %c0_i32, %c0_i32_0 : i32, i32
  }
  func.func @transform_2(%arg0: i32) -> (i32, i32) {
    %c0_i32 = arith.constant 0 : i32
    %c0_i32_0 = arith.constant 0 : i32
    %c0_i32_1 = arith.constant 0 : i32
    return %c0_i32, %c0_i32_0 : i32, i32
  }
  func.func @transform_3(%arg0: i32) -> (i32, i32) {
    %c0_i32 = arith.constant 0 : i32
    %c0_i32_0 = arith.constant 0 : i32
    return %arg0, %c0_i32 : i32, i32
  }
}

</mosaic_0001>

<llo_original>
// kernel: trans_layer_rule2_forward.1
$region0: #{trans_layer_rule2_forward.1}
  #allocation0 [shape = 'u32[]', space=smem, size = 0x4, offset = 0x4, fixed_abs, tag = 'smem constant byte address 0x4 - core index']
  #allocation1 [shape = 'u32[144,128]{1,0:T(1,128)}', space=vmem, size = 0x12000, scoped, tag = 'internal scratch']
  %s0 = inlined_call_operand.vmem [shape: f32[512,36], index: 0, kind: input, shape index: {}]
  %s1 = inlined_call_operand.vmem [shape: f32[36,128], index: 1, kind: input, shape index: {}]
  %s2 = inlined_call_operand.vmem [shape: f32[1,128], index: 2, kind: input, shape index: {}]
  %s3 = inlined_call_operand.vmem [shape: f32[512,128], index: 3, kind: output, shape index: {}]
  %s4 = sld [smem:[#allocation0]]
  $region45: #{trans_layer_rule2_forward.1} parent=0
    _
  %s6 = ssub.s32 1, %s4
  %s7 = scalar_select 0, %s6, %s4
  loop: start=0, step=1, limit=4
  $region2: #{trans_layer_rule2_forward.1} parent=0 // loop_pre_header
    _
  $region3: #{trans_layer_rule2_forward.1} parent=0 // loop_header
    %s9 = sphi 0, %s13
    %p10 = scmp.ge.s32.totalorder %s9, 4
    %s19 = sphi 0, %s21
    %s22 = sphi 0, %s19
    %s23 = sphi 0, %s22
    %s39 = sphi 0, %s23
    %s43 = sphi 0, %s43
    %s45 = sphi 0, %s43
    %s46 = sphi 0, %s45
    %s60 = sphi 0, %s46
    %s64 = sphi 0, %s64
    %s66 = sphi 0, %s64
    %s67 = sphi 0, %s66
    %s81 = sphi 0, %s67
    %s87 = sphi 0, %s89
    %s90 = sphi 0, %s87
    %s91 = sphi 0, %s90
    %s107 = sphi 0, %s91
  $region4: #{trans_layer_rule2_forward.1} parent=0 // loop_header_branch
    %12 = sbr.rel (%p10) target = $region8
  $region5: #{trans_layer_rule2_forward.1} parent=0 // loop_body
    %s14 = ssub.s32 %s9, 1
    %s15 = ssub.s32 %s9, 2
    %s16 = sadd.s32 %s9, 1
    %s17 = ssub.s32 %s9, %s16
    %p18 = scmp.eq.s32.totalorder %s17, 0
    %s20 = sadd.s32 %s19, 1
    %s21 = scalar_select %p18, %s19, %s20
    %p24 = pneg %p18
    %p25 = scmp.eq.s32.totalorder %s9, 1
    %p26 = por %p24, %p25
    %p27 = scmp.ne.s32.totalorder %s19, %s22
    %p28 = scmp.eq.s32.totalorder %s9, 0
    %p29 = por %p27, %p28
    %p30 = scmp.ne.s32.totalorder %s19, %s22
    %p31 = scmp.eq.s32.totalorder %s14, 1
    %p32 = por %p30, %p31
    %p33 = scmp.ne.s32.totalorder %s22, %s23
    %p34 = scmp.eq.s32.totalorder %s14, 0
    %p35 = por %p33, %p34
    %p36 = scmp.ne.s32.totalorder %s22, %s23
    %p37 = scmp.eq.s32.totalorder %s15, 1
    %p38 = por %p36, %p37
    %p40 = scmp.ne.s32.totalorder %s23, %s39
    %p41 = scmp.eq.s32.totalorder %s15, 0
    %p42 = por %p40, %p41
    %s44 = sadd.s32 %s43, 1
    %p47 = scmp.eq.s32.totalorder %s9, 1
    %p48 = scmp.ne.s32.totalorder %s43, %s45
    %p49 = scmp.eq.s32.totalorder %s9, 0
    %p50 = por %p48, %p49
    %p51 = scmp.ne.s32.totalorder %s43, %s45
    %p52 = scmp.eq.s32.totalorder %s14, 1
    %p53 = por %p51, %p52
    %p54 = scmp.ne.s32.totalorder %s45, %s46
    %p55 = scmp.eq.s32.totalorder %s14, 0
    %p56 = por %p54, %p55
    %p57 = scmp.ne.s32.totalorder %s45, %s46
    %p58 = scmp.eq.s32.totalorder %s15, 1
    %p59 = por %p57, %p58
    %p61 = scmp.ne.s32.totalorder %s46, %s60
    %p62 = scmp.eq.s32.totalorder %s15, 0
    %p63 = por %p61, %p62
    %s65 = sadd.s32 %s64, 1
    %p68 = scmp.eq.s32.totalorder %s9, 1
    %p69 = scmp.ne.s32.totalorder %s64, %s66
    %p70 = scmp.eq.s32.totalorder %s9, 0
    %p71 = por %p69, %p70
    %p72 = scmp.ne.s32.totalorder %s64, %s66
    %p73 = scmp.eq.s32.totalorder %s14, 1
    %p74 = por %p72, %p73
    %p75 = scmp.ne.s32.totalorder %s66, %s67
    %p76 = scmp.eq.s32.totalorder %s14, 0
    %p77 = por %p75, %p76
    %p78 = scmp.ne.s32.totalorder %s66, %s67
    %p79 = scmp.eq.s32.totalorder %s15, 1
    %p80 = por %p78, %p79
    %p82 = scmp.ne.s32.totalorder %s67, %s81
    %p83 = scmp.eq.s32.totalorder %s15, 0
    %p84 = por %p82, %p83
    %s85 = ssub.s32 %s9, %s16
    %p86 = scmp.eq.s32.totalorder %s85, 0
    %s88 = sadd.s32 %s87, 1
    %s89 = scalar_select %p86, %s87, %s88
    %p92 = pneg %p86
    %p93 = scmp.eq.s32.totalorder %s9, 1
    %p94 = por %p92, %p93
    %p95 = scmp.ne.s32.totalorder %s87, %s90
    %p96 = scmp.eq.s32.totalorder %s9, 0
    %p97 = por %p95, %p96
    %p98 = scmp.ne.s32.totalorder %s87, %s90
    %p99 = scmp.eq.s32.totalorder %s14, 1
    %p100 = por %p98, %p99
    %p101 = scmp.ne.s32.totalorder %s90, %s91
    %p102 = scmp.eq.s32.totalorder %s14, 0
    %p103 = por %p101, %p102
    %p104 = scmp.ne.s32.totalorder %s90, %s91
    %p105 = scmp.eq.s32.totalorder %s15, 1
    %p106 = por %p104, %p105
    %p108 = scmp.ne.s32.totalorder %s91, %s107
    %p109 = scmp.eq.s32.totalorder %s15, 0
    %p110 = por %p108, %p109
    %p111 = scmp.le.s32.totalorder 1, %s9
    %p112 = scmp.lt.s32.totalorder %s9, 3
    %p113 = pnand %p111, %p112
    %p114 = pneg %p113
    // Predicated region
    $region9: #{trans_layer_rule2_forward.1} parent=5 // pred_check
      _
    $region10: #{trans_layer_rule2_forward.1} parent=5 // pred_check_branch
      %116 = sbr.rel (%p113) target = $region12
    $region11: #{trans_layer_rule2_forward.1} parent=5 // pred_region
      %s117 = ssub.s32 %s9, 1
      // Predicated region
      $region13: #{trans_layer_rule2_forward.1} parent=11 // pred_check
        %p118 = pneg %p56
      $region14: #{trans_layer_rule2_forward.1} parent=11 // pred_check_branch
        %120 = sbr.rel (%p118) target = $region16
      $region15: #{trans_layer_rule2_forward.1} parent=11 // pred_region
        _
      $region16: #{trans_layer_rule2_forward.1} parent=11 // pred_fallthru
        _
      // Predicated region
      $region17: #{trans_layer_rule2_forward.1} parent=11 // pred_check
        %p121 = pneg %p77
      $region18: #{trans_layer_rule2_forward.1} parent=11 // pred_check_branch
        %123 = sbr.rel (%p121) target = $region20
      $region19: #{trans_layer_rule2_forward.1} parent=11 // pred_region
        _
      $region20: #{trans_layer_rule2_forward.1} parent=11 // pred_fallthru
        _
    $region12: #{trans_layer_rule2_forward.1} parent=5 // pred_fallthru
      _
    %p124 = scmp.lt.s32.totalorder %s9, 2
    // Predicated region
    $region21: #{trans_layer_rule2_forward.1} parent=5 // pred_check
      %p125 = pneg %p124
    $region22: #{trans_layer_rule2_forward.1} parent=5 // pred_check_branch
      %127 = sbr.rel (%p125) target = $region24
    $region23: #{trans_layer_rule2_forward.1} parent=5 // pred_region
      // Predicated region
      $region25: #{trans_layer_rule2_forward.1} parent=23 // pred_check
        %p128 = pneg %p29
      $region26: #{trans_layer_rule2_forward.1} parent=23 // pred_check_branch
        %130 = sbr.rel (%p128) target = $region28
      $region27: #{trans_layer_rule2_forward.1} parent=23 // pred_region
        %s131 = smul.u32 32, %s9
        %p132 = scmp.lt.s32.totalorder %s131, 63
        %s133 = scalar_select %p132, %s131, 63
        %s134 = smul.addr %s133, 8
        %s135 = scalar_lea.vmem %s0, %s134
        %s136 = smul.u32 32, %s9
      $region28: #{trans_layer_rule2_forward.1} parent=23 // pred_fallthru
        _
    $region24: #{trans_layer_rule2_forward.1} parent=5 // pred_fallthru
      _
    %p137 = scmp.le.s32.totalorder 1, %s9
    %p138 = scmp.lt.s32.totalorder %s9, 3
    %p139 = pnand %p137, %p138
    %p140 = pneg %p139
    // Predicated region
    $region29: #{trans_layer_rule2_forward.1} parent=5 // pred_check
      _
    $region30: #{trans_layer_rule2_forward.1} parent=5 // pred_check_branch
      %142 = sbr.rel (%p139) target = $region32
    $region31: #{trans_layer_rule2_forward.1} parent=5 // pred_region
      %s143 = ssub.s32 %s9, 1
      %s144 = smul.u32 32, %s14
      %p145 = scmp.lt.s32.totalorder %s144, 63
      %s146 = scalar_select %p145, %s144, 63
      %s147 = smul.addr %s146, 8
      %s148 = scalar_lea.vmem %s0, %s147
      %p149 = pneg %p35
      %p150 = pneg %p32
      %p151 = pneg %p56
      %p152 = pneg %p53
      %p153 = pneg %p77
      %p154 = pneg %p74
      %p155 = pneg %p103
      %p156 = pneg %p100
      %s157 = smul.u32 32, %s14
      %p158 = scmp.lt.s32.totalorder %s157, 63
      %s159 = scalar_select %p158, %s157, 63
      %s160 = smul.addr %s159, 8
      %s161 = scalar_lea.vmem %s3, %s160
      %s162 = smul.u32 32, %s14
      %p163 = scmp.lt.s32.totalorder %s162, 63
      %s164 = scalar_select %p163, %s162, 63
      %s165 = smul.addr %s164, 8
      %s166 = scalar_lea.vmem %s0, %s165
      %s167 = smul.u32 32, %s14
      %s168 = smul.u32 32, %s14
      %p169 = scmp.lt.s32.totalorder %s168, 63
      %s170 = scalar_select %p169, %s168, 63
      %s171 = smul.addr %s170, 8
      %s172 = scalar_lea.vmem %s3, %s171
      %s173 = smul.u32 32, %s14
      %v174 = vld [vmem:[%s166] sm:$0xff]
      %v175 = vld [vmem:[%s166 + $0x8] sm:$0xff]
      %v176 = vld [vmem:[%s166 + $0x10] sm:$0xff]
      %v177 = vld [vmem:[%s166 + $0x18] sm:$0xff]
      %v178 = vld [vmem:[%s166 + $0x20] sm:$0xff]
      %v179 = vld [vmem:[%s166 + $0x28] sm:$0xff]
      %v180 = vld [vmem:[%s166 + $0x30] sm:$0xff]
      %v181 = vld [vmem:[%s166 + $0x38] sm:$0xff]
      %v182 = vld [vmem:[%s166 + $0x40] sm:$0xff]
      %v183 = vld [vmem:[%s166 + $0x48] sm:$0xff]
      %v184 = vld [vmem:[%s166 + $0x50] sm:$0xff]
      %v185 = vld [vmem:[%s166 + $0x58] sm:$0xff]
      %v186 = vld [vmem:[%s166 + $0x60] sm:$0xff]
      %v187 = vld [vmem:[%s166 + $0x68] sm:$0xff]
      %v188 = vld [vmem:[%s166 + $0x70] sm:$0xff]
      %v189 = vld [vmem:[%s166 + $0x78] sm:$0xff]
      %v190 = vld [vmem:[%s166 + $0x80] sm:$0xff]
      %v191 = vld [vmem:[%s166 + $0x88] sm:$0xff]
      %v192 = vld [vmem:[%s166 + $0x90] sm:$0xff]
      %v193 = vld [vmem:[%s166 + $0x98] sm:$0xff]
      %v194 = vld [vmem:[%s166 + $0xa0] sm:$0xff]
      %v195 = vld [vmem:[%s166 + $0xa8] sm:$0xff]
      %v196 = vld [vmem:[%s166 + $0xb0] sm:$0xff]
      %v197 = vld [vmem:[%s166 + $0xb8] sm:$0xff]
      %v198 = vld [vmem:[%s166 + $0xc0] sm:$0xff]
      %v199 = vld [vmem:[%s166 + $0xc8] sm:$0xff]
      %v200 = vld [vmem:[%s166 + $0xd0] sm:$0xff]
      %v201 = vld [vmem:[%s166 + $0xd8] sm:$0xff]
      %v202 = vld [vmem:[%s166 + $0xe0] sm:$0xff]
      %v203 = vld [vmem:[%s166 + $0xe8] sm:$0xff]
      %v204 = vld [vmem:[%s166 + $0xf0] sm:$0xff]
      %v205 = vld [vmem:[%s166 + $0xf8] sm:$0xff]
      %v206 = vld [vmem:[%s1] sm:$0xff]
      %v207 = vld [vmem:[%s1 + $0x8] sm:$0xff]
      %v208 = vld [vmem:[%s1 + $0x10] sm:$0xff]
      %v209 = vld [vmem:[%s1 + $0x18] sm:$0xff]
      %v210 = vld [vmem:[%s1 + $0x20] sm:$0xf]
      %v211 = vld [vmem:[%s2] sm:$0x1]
      %v213 = vlaneseq
      %v214 = vshrl.u32 %v213, 7
      %v215 = vsub.s32 0, %v214
      %v216 = vrot.slane %v211, %v215
      %vm218 = vcmask 293888
      %v220 = vsel %vm218, %v174, 0
      %v223 = vsel %vm218, %v175, 0
      %v226 = vsel %vm218, %v176, 0
      %v229 = vsel %vm218, %v177, 0
      %v232 = vsel %vm218, %v178, 0
      %v235 = vsel %vm218, %v179, 0
      %v238 = vsel %vm218, %v180, 0
      %v241 = vsel %vm218, %v181, 0
      %v244 = vsel %vm218, %v182, 0
      %v247 = vsel %vm218, %v183, 0
      %v250 = vsel %vm218, %v184, 0
      %v253 = vsel %vm218, %v185, 0
      %v256 = vsel %vm218, %v186, 0
      %v259 = vsel %vm218, %v187, 0
      %v262 = vsel %vm218, %v188, 0
      %v265 = vsel %vm218, %v189, 0
      %v268 = vsel %vm218, %v190, 0
      %v271 = vsel %vm218, %v191, 0
      %v274 = vsel %vm218, %v192, 0
      %v277 = vsel %vm218, %v193, 0
      %v280 = vsel %vm218, %v194, 0
      %v283 = vsel %vm218, %v195, 0
      %v286 = vsel %vm218, %v196, 0
      %v289 = vsel %vm218, %v197, 0
      %v292 = vsel %vm218, %v198, 0
      %v295 = vsel %vm218, %v199, 0
      %v298 = vsel %vm218, %v200, 0
      %v301 = vsel %vm218, %v201, 0
      %v304 = vsel %vm218, %v202, 0
      %v307 = vsel %vm218, %v203, 0
      %v310 = vsel %vm218, %v204, 0
      %v313 = vsel %vm218, %v205, 0
      %vm315 = vcmask 1043456
      %v317 = vsel %vm315, %v210, 0
      %319 = vmatprep.subr.mxu0 0.0
      %320 = vmatpush1.msra.mxu0 %v206
      %321 = vmatprep.subr.mxu0 0.0
      %322 = vmatpush1.msra.mxu0 %v207
      %323 = vmatprep.subr.mxu0 0.0
      %324 = vmatpush1.msra.mxu0 %v208
      %325 = vmatprep.subr.mxu0 0.0
      %326 = vmatpush1.msra.mxu0 %v209
      %327 = vmatprep.subr.mxu0 0.0
      %328 = vmatpush1.msra.mxu0 %v317
      %329 = vmatprep.subr.mxu0 0.0
      %330 = vmatpush1.msra.mxu0 0.0
      %331 = vmatprep.subr.mxu0 0.0
      %332 = vmatpush1.msra.mxu0 0.0
      %333 = vmatprep.subr.mxu0 0.0
      %334 = vmatpush1.msra.mxu0 0.0
      %335 = vmatprep.subr.mxu0 0.0
      %336 = vmatpush1.msra.mxu0 0.0
      %337 = vmatprep.subr.mxu0 0.0
      %338 = vmatpush1.msra.mxu0 0.0
      %339 = vmatprep.subr.mxu0 0.0
      %340 = vmatpush1.msra.mxu0 0.0
      %341 = vmatprep.subr.mxu0 0.0
      %342 = vmatpush1.msra.mxu0 0.0
      %343 = vmatprep.subr.mxu0 0.0
      %344 = vmatpush1.msra.mxu0 0.0
      %345 = vmatprep.subr.mxu0 0.0
      %346 = vmatpush1.msra.mxu0 0.0
      %347 = vmatprep.subr.mxu0 0.0
      %348 = vmatpush1.msra.mxu0 0.0
      %349 = vmatprep.subr.mxu0 0.0
      %350 = vmatpush1.msra.mxu0 0.0
      %351 = vmatprep.subr.mxu0 0.0
      %352 = vmatpush1.msra.mxu0 0.0
      %353 = vmatprep.subr.mxu0 0.0
      %354 = vmatpush1.msra.mxu0 0.0
      %355 = vmatprep.subr.mxu0 0.0
      %356 = vmatpush1.msra.mxu0 0.0
      %357 = vmatprep.subr.mxu0 0.0
      %358 = vmatpush1.msra.mxu0 0.0
      %359 = vmatprep.subr.mxu0 0.0
      %360 = vmatpush1.msra.mxu0 0.0
      %361 = vmatprep.subr.mxu0 0.0
      %362 = vmatpush1.msra.mxu0 0.0
      %363 = vmatprep.subr.mxu0 0.0
      %364 = vmatpush1.msra.mxu0 0.0
      %365 = vmatprep.subr.mxu0 0.0
      %366 = vmatpush1.msra.mxu0 0.0
      %367 = vmatprep.subr.mxu0 0.0
      %368 = vmatpush1.msra.mxu0 0.0
      %369 = vmatprep.subr.mxu0 0.0
      %370 = vmatpush1.msra.mxu0 0.0
      %371 = vmatprep.subr.mxu0 0.0
      %372 = vmatpush1.msra.mxu0 0.0
      %373 = vmatprep.subr.mxu0 0.0
      %374 = vmatpush1.msra.mxu0 0.0
      %375 = vmatprep.subr.mxu0 0.0
      %376 = vmatpush1.msra.mxu0 0.0
      %377 = vmatprep.subr.mxu0 0.0
      %378 = vmatpush1.msra.mxu0 0.0
      %379 = vmatprep.subr.mxu0 0.0
      %380 = vmatpush1.msra.mxu0 0.0
      %381 = vmatprep.subr.mxu0 0.0
      %382 = vmatpush1.msra.mxu0 0.0
      %383 = vmatprep.mubr.f32.mxu0 0.0
      %384 = vmatmul.mubr.f32.gmra.mrb[0].mxu0 %v220
      %v385 = vpop.f32.mrb[0].mxu0
      %v386 = vadd.f32 %v216, %v385
      %v387 = vpop.f32.mrb[0].mxu0
      %388 = vmatprep.mubr.f32.mxu0 0.0
      %389 = vmatmul.mubr.f32.gmra.mrb[0].mxu0 %v223
      %v390 = vpop.f32.mrb[0].mxu0
      %v391 = vadd.f32 %v216, %v390
      %v392 = vpop.f32.mrb[0].mxu0
      %393 = vmatprep.mubr.f32.mxu0 0.0
      %394 = vmatmul.mubr.f32.gmra.mrb[0].mxu0 %v226
      %v395 = vpop.f32.mrb[0].mxu0
      %v396 = vadd.f32 %v216, %v395
      %v397 = vpop.f32.mrb[0].mxu0
      %398 = vmatprep.mubr.f32.mxu0 0.0
      %399 = vmatmul.mubr.f32.gmra.mrb[0].mxu0 %v229
      %v400 = vpop.f32.mrb[0].mxu0
      %v401 = vadd.f32 %v216, %v400
      %v402 = vpop.f32.mrb[0].mxu0
      %403 = vmatprep.mubr.f32.mxu0 0.0
      %404 = vmatmul.mubr.f32.gmra.mrb[0].mxu0 %v232
      %v405 = vpop.f32.mrb[0].mxu0
      %v406 = vadd.f32 %v216, %v405
      %v407 = vpop.f32.mrb[0].mxu0
      %408 = vmatprep.mubr.f32.mxu0 0.0
      %409 = vmatmul.mubr.f32.gmra.mrb[0].mxu0 %v235
      %v410 = vpop.f32.mrb[0].mxu0
      %v411 = vadd.f32 %v216, %v410
      %v412 = vpop.f32.mrb[0].mxu0
      %413 = vmatprep.mubr.f32.mxu0 0.0
      %414 = vmatmul.mubr.f32.gmra.mrb[0].mxu0 %v238
      %v415 = vpop.f32.mrb[0].mxu0
      %v416 = vadd.f32 %v216, %v415
      %v417 = vpop.f32.mrb[0].mxu0
      %418 = vmatprep.mubr.f32.mxu0 0.0
      %419 = vmatmul.mubr.f32.gmra.mrb[0].mxu0 %v241
      %v420 = vpop.f32.mrb[0].mxu0
      %v421 = vadd.f32 %v216, %v420
      %v422 = vpop.f32.mrb[0].mxu0
      %423 = vmatprep.mubr.f32.mxu0 0.0
      %424 = vmatmul.mubr.f32.gmra.mrb[0].mxu0 %v244
      %v425 = vpop.f32.mrb[0].mxu0
      %v426 = vadd.f32 %v216, %v425
      %v427 = vpop.f32.mrb[0].mxu0
      %428 = vmatprep.mubr.f32.mxu0 0.0
      %429 = vmatmul.mubr.f32.gmra.mrb[0].mxu0 %v247
      %v430 = vpop.f32.mrb[0].mxu0
      %v431 = vadd.f32 %v216, %v430
      %v432 = vpop.f32.mrb[0].mxu0
      %433 = vmatprep.mubr.f32.mxu0 0.0
      %434 = vmatmul.mubr.f32.gmra.mrb[0].mxu0 %v250
      %v435 = vpop.f32.mrb[0].mxu0
      %v436 = vadd.f32 %v216, %v435
      %v437 = vpop.f32.mrb[0].mxu0
      %438 = vmatprep.mubr.f32.mxu0 0.0
      %439 = vmatmul.mubr.f32.gmra.mrb[0].mxu0 %v253
      %v440 = vpop.f32.mrb[0].mxu0
      %v441 = vadd.f32 %v216, %v440
      %v442 = vpop.f32.mrb[0].mxu0
      %443 = vmatprep.mubr.f32.mxu0 0.0
      %444 = vmatmul.mubr.f32.gmra.mrb[0].mxu0 %v256
      %v445 = vpop.f32.mrb[0].mxu0
      %v446 = vadd.f32 %v216, %v445
      %v447 = vpop.f32.mrb[0].mxu0
      %448 = vmatprep.mubr.f32.mxu0 0.0
      %449 = vmatmul.mubr.f32.gmra.mrb[0].mxu0 %v259
      %v450 = vpop.f32.mrb[0].mxu0
      %v451 = vadd.f32 %v216, %v450
      %v452 = vpop.f32.mrb[0].mxu0
      %453 = vmatprep.mubr.f32.mxu0 0.0
      %454 = vmatmul.mubr.f32.gmra.mrb[0].mxu0 %v262
      %v455 = vpop.f32.mrb[0].mxu0
      %v456 = vadd.f32 %v216, %v455
      %v457 = vpop.f32.mrb[0].mxu0
      %458 = vmatprep.mubr.f32.mxu0 0.0
      %459 = vmatmul.mubr.f32.gmra.mrb[0].mxu0 %v265
      %v460 = vpop.f32.mrb[0].mxu0
      %v461 = vadd.f32 %v216, %v460
      %v462 = vpop.f32.mrb[0].mxu0
      %463 = vmatprep.mubr.f32.mxu0 0.0
      %464 = vmatmul.mubr.f32.gmra.mrb[0].mxu0 %v268
      %v465 = vpop.f32.mrb[0].mxu0
      %v466 = vadd.f32 %v216, %v465
      %v467 = vpop.f32.mrb[0].mxu0
      %468 = vmatprep.mubr.f32.mxu0 0.0
      %469 = vmatmul.mubr.f32.gmra.mrb[0].mxu0 %v271
      %v470 = vpop.f32.mrb[0].mxu0
      %v471 = vadd.f32 %v216, %v470
      %v472 = vpop.f32.mrb[0].mxu0
      %473 = vmatprep.mubr.f32.mxu0 0.0
      %474 = vmatmul.mubr.f32.gmra.mrb[0].mxu0 %v274
      %v475 = vpop.f32.mrb[0].mxu0
      %v476 = vadd.f32 %v216, %v475
      %v477 = vpop.f32.mrb[0].mxu0
      %478 = vmatprep.mubr.f32.mxu0 0.0
      %479 = vmatmul.mubr.f32.gmra.mrb[0].mxu0 %v277
      %v480 = vpop.f32.mrb[0].mxu0
      %v481 = vadd.f32 %v216, %v480
      %v482 = vpop.f32.mrb[0].mxu0
      %483 = vmatprep.mubr.f32.mxu0 0.0
      %484 = vmatmul.mubr.f32.gmra.mrb[0].mxu0 %v280
      %v485 = vpop.f32.mrb[0].mxu0
      %v486 = vadd.f32 %v216, %v485
      %v487 = vpop.f32.mrb[0].mxu0
      %488 = vmatprep.mubr.f32.mxu0 0.0
      %489 = vmatmul.mubr.f32.gmra.mrb[0].mxu0 %v283
      %v490 = vpop.f32.mrb[0].mxu0
      %v491 = vadd.f32 %v216, %v490
      %v492 = vpop.f32.mrb[0].mxu0
      %493 = vmatprep.mubr.f32.mxu0 0.0
      %494 = vmatmul.mubr.f32.gmra.mrb[0].mxu0 %v286
      %v495 = vpop.f32.mrb[0].mxu0
      %v496 = vadd.f32 %v216, %v495
      %v497 = vpop.f32.mrb[0].mxu0
      %498 = vmatprep.mubr.f32.mxu0 0.0
      %499 = vmatmul.mubr.f32.gmra.mrb[0].mxu0 %v289
      %v500 = vpop.f32.mrb[0].mxu0
      %v501 = vadd.f32 %v216, %v500
      %v502 = vpop.f32.mrb[0].mxu0
      %503 = vmatprep.mubr.f32.mxu0 0.0
      %504 = vmatmul.mubr.f32.gmra.mrb[0].mxu0 %v292
      %v505 = vpop.f32.mrb[0].mxu0
      %v506 = vadd.f32 %v216, %v505
      %v507 = vpop.f32.mrb[0].mxu0
      %508 = vmatprep.mubr.f32.mxu0 0.0
      %509 = vmatmul.mubr.f32.gmra.mrb[0].mxu0 %v295
      %v510 = vpop.f32.mrb[0].mxu0
      %v511 = vadd.f32 %v216, %v510
      %v512 = vpop.f32.mrb[0].mxu0
      %513 = vmatprep.mubr.f32.mxu0 0.0
      %514 = vmatmul.mubr.f32.gmra.mrb[0].mxu0 %v298
      %v515 = vpop.f32.mrb[0].mxu0
      %v516 = vadd.f32 %v216, %v515
      %v517 = vpop.f32.mrb[0].mxu0
      %518 = vmatprep.mubr.f32.mxu0 0.0
      %519 = vmatmul.mubr.f32.gmra.mrb[0].mxu0 %v301
      %v520 = vpop.f32.mrb[0].mxu0
      %v521 = vadd.f32 %v216, %v520
      %v522 = vpop.f32.mrb[0].mxu0
      %523 = vmatprep.mubr.f32.mxu0 0.0
      %524 = vmatmul.mubr.f32.gmra.mrb[0].mxu0 %v304
      %v525 = vpop.f32.mrb[0].mxu0
      %v526 = vadd.f32 %v216, %v525
      %v527 = vpop.f32.mrb[0].mxu0
      %528 = vmatprep.mubr.f32.mxu0 0.0
      %529 = vmatmul.mubr.f32.gmra.mrb[0].mxu0 %v307
      %v530 = vpop.f32.mrb[0].mxu0
      %v531 = vadd.f32 %v216, %v530
      %v532 = vpop.f32.mrb[0].mxu0
      %533 = vmatprep.mubr.f32.mxu0 0.0
      %534 = vmatmul.mubr.f32.gmra.mrb[0].mxu0 %v310
      %v535 = vpop.f32.mrb[0].mxu0
      %v536 = vadd.f32 %v216, %v535
      %v537 = vpop.f32.mrb[0].mxu0
      %538 = vmatprep.mubr.f32.mxu0 0.0
      %539 = vmatmul.mubr.f32.gmra.mrb[0].mxu0 %v313
      %v540 = vpop.f32.mrb[0].mxu0
      %v541 = vadd.f32 %v216, %v540
      %v542 = vpop.f32.mrb[0].mxu0
      %543 = vdwg.mxu0
      %544 = vst [vmem:[%s172] sm:$0xff] %v386
      %545 = vst [vmem:[%s172 + $0x8] sm:$0xff] %v391
      %546 = vst [vmem:[%s172 + $0x10] sm:$0xff] %v396
      %547 = vst [vmem:[%s172 + $0x18] sm:$0xff] %v401
      %548 = vst [vmem:[%s172 + $0x20] sm:$0xff] %v406
      %549 = vst [vmem:[%s172 + $0x28] sm:$0xff] %v411
      %550 = vst [vmem:[%s172 + $0x30] sm:$0xff] %v416
      %551 = vst [vmem:[%s172 + $0x38] sm:$0xff] %v421
      %552 = vst [vmem:[%s172 + $0x40] sm:$0xff] %v426
      %553 = vst [vmem:[%s172 + $0x48] sm:$0xff] %v431
      %554 = vst [vmem:[%s172 + $0x50] sm:$0xff] %v436
      %555 = vst [vmem:[%s172 + $0x58] sm:$0xff] %v441
      %556 = vst [vmem:[%s172 + $0x60] sm:$0xff] %v446
      %557 = vst [vmem:[%s172 + $0x68] sm:$0xff] %v451
      %558 = vst [vmem:[%s172 + $0x70] sm:$0xff] %v456
      %559 = vst [vmem:[%s172 + $0x78] sm:$0xff] %v461
      %560 = vst [vmem:[%s172 + $0x80] sm:$0xff] %v466
      %561 = vst [vmem:[%s172 + $0x88] sm:$0xff] %v471
      %562 = vst [vmem:[%s172 + $0x90] sm:$0xff] %v476
      %563 = vst [vmem:[%s172 + $0x98] sm:$0xff] %v481
      %564 = vst [vmem:[%s172 + $0xa0] sm:$0xff] %v486
      %565 = vst [vmem:[%s172 + $0xa8] sm:$0xff] %v491
      %566 = vst [vmem:[%s172 + $0xb0] sm:$0xff] %v496
      %567 = vst [vmem:[%s172 + $0xb8] sm:$0xff] %v501
      %568 = vst [vmem:[%s172 + $0xc0] sm:$0xff] %v506
      %569 = vst [vmem:[%s172 + $0xc8] sm:$0xff] %v511
      %570 = vst [vmem:[%s172 + $0xd0] sm:$0xff] %v516
      %571 = vst [vmem:[%s172 + $0xd8] sm:$0xff] %v521
      %572 = vst [vmem:[%s172 + $0xe0] sm:$0xff] %v526
      %573 = vst [vmem:[%s172 + $0xe8] sm:$0xff] %v531
      %574 = vst [vmem:[%s172 + $0xf0] sm:$0xff] %v536
      %575 = vst [vmem:[%s172 + $0xf8] sm:$0xff] %v541
      %s576 = smul.u32 32, %s14
      %p577 = scmp.lt.s32.totalorder %s576, 63
      %s578 = scalar_select %p577, %s576, 63
      %s579 = smul.addr %s578, 8
      %s580 = scalar_lea.vmem %s3, %s579
      // Predicated region
      $region33: #{trans_layer_rule2_forward.1} parent=31 // pred_check
        %p581 = pneg %p100
      $region34: #{trans_layer_rule2_forward.1} parent=31 // pred_check_branch
        %583 = sbr.rel (%p581) target = $region36
      $region35: #{trans_layer_rule2_forward.1} parent=31 // pred_region
        %s584 = smul.u32 32, %s14
      $region36: #{trans_layer_rule2_forward.1} parent=31 // pred_fallthru
        _
    $region32: #{trans_layer_rule2_forward.1} parent=5 // pred_fallthru
      _
    %p585 = scmp.le.s32.totalorder 2, %s9
    // Predicated region
    $region37: #{trans_layer_rule2_forward.1} parent=5 // pred_check
      %p586 = pneg %p585
    $region38: #{trans_layer_rule2_forward.1} parent=5 // pred_check_branch
      %588 = sbr.rel (%p586) target = $region40
    $region39: #{trans_layer_rule2_forward.1} parent=5 // pred_region
      %s589 = ssub.s32 %s9, 2
      // Predicated region
      $region41: #{trans_layer_rule2_forward.1} parent=39 // pred_check
        %p590 = pneg %p106
      $region42: #{trans_layer_rule2_forward.1} parent=39 // pred_check_branch
        %592 = sbr.rel (%p590) target = $region44
      $region43: #{trans_layer_rule2_forward.1} parent=39 // pred_region
        %s593 = smul.u32 32, %s15
        %p594 = scmp.lt.s32.totalorder %s593, 63
        %s595 = scalar_select %p594, %s593, 63
        %s596 = smul.addr %s595, 8
        %s597 = scalar_lea.vmem %s3, %s596
      $region44: #{trans_layer_rule2_forward.1} parent=39 // pred_fallthru
        _
    $region40: #{trans_layer_rule2_forward.1} parent=5 // pred_fallthru
      _
  $region6: #{trans_layer_rule2_forward.1} parent=0 // loop_footer
    %s13 = sadd.s32 1, %s9
  $region7: #{trans_layer_rule2_forward.1} parent=0 // loop_footer_branch
    %8 = sbr.rel target = $region3
  $region8: #{trans_layer_rule2_forward.1} parent=0 // loop_exit
    _

</llo_original>
